<compile_context>
chip_gen: v7x
topology: tpu7x:2x2x1
jax: 0.10.0
libtpu: 0.0.40
codegen_flags: <defaults>
</compile_context>

<pallas_src>
from functools import partial

import jax
import jax.numpy as jnp
from jax.experimental import pallas as pl
from jax.experimental.pallas import tpu as pltpu


def value_net_kernel(state_ref, visual_ref, w1_ref, w2_ref, w3_ref, w4_ref,
                     b12_ref, b3_ref, b4_ref, out_ref):
    # In-kernel cast to the MXU compute dtype (hides under MXU slack).
    s = state_ref[...].astype(w1_ref.dtype)      # (tb, state_dim) bf16
    v = visual_ref[...].astype(w2_ref.dtype)     # (tb, visual_dim) bf16

    # Fused layers 1+2 (block-diagonal fusion as two sub-dots into the
    # 256-padded hidden): cols [0:25] = state branch, [25:153] = visual
    # branch, [153:256] stay exactly zero (zero weights + zero bias).
    emb = (jnp.dot(s, w1_ref[...], preferred_element_type=jnp.float32)
           + jnp.dot(v, w2_ref[...], preferred_element_type=jnp.float32)
           + b12_ref[...])
    emb = jnp.maximum(emb, 0.0)                  # (tb, 256) f32

    # Layer 3: one clean 256-wide K pass on the MXU (v6e/v7x MXU width).
    combined = jnp.dot(emb.astype(w3_ref.dtype), w3_ref[...],
                       preferred_element_type=jnp.float32) + b3_ref[...]
    combined = jnp.maximum(combined, 0.0)        # (tb, 128) f32

    # Layer 4 (128 -> 1), produced lane-dense: (1,128) @ (128,tb) -> (1,tb).
    out_row = jnp.dot(w4_ref[...], combined.T,
                      preferred_element_type=jnp.float32) + b4_ref[0]
    out_ref[0] = out_row                         # out_ref block is (1, 1, tb)


def _round_up(x, m):
    return ((x + m - 1) // m) * m


def prepare_params(params, state_dim, visual_dim, hidden_pad=256,
                   compute_dtype=jnp.bfloat16):
    """One-time layout prep (hoisted out of the per-call hot path)."""
    (w1, b1), (w2, b2), (w3, b3), (w4, b4) = params
    h1, h2, h3 = 25, 128, 128
    fused = h1 + h2  # 153

    w1p = jnp.zeros((state_dim, hidden_pad), jnp.float32).at[:, :h1].set(w1.T)
    w2p = (jnp.zeros((visual_dim, hidden_pad), jnp.float32)
           .at[:, h1:fused].set(w2.T))
    w3p = jnp.zeros((hidden_pad, h3), jnp.float32).at[:fused, :].set(w3.T)

    b12p = (jnp.zeros((1, hidden_pad), jnp.float32)
            .at[0, :fused].set(jnp.concatenate([b1, b2])))
    b3r = b3.reshape(1, h3).astype(jnp.float32)
    w4r = w4.reshape(1, h3).astype(jnp.float32)     # kept f32 (final layer)
    b4s = b4.reshape(1).astype(jnp.float32)         # SMEM scalar

    return (w1p.astype(compute_dtype), w2p.astype(compute_dtype),
            w3p.astype(compute_dtype), w4r, b12p, b3r, b4s)


def _batch_dim_semantics():
    """CORE_PARALLEL on v7x (2 TensorCores/chip); plain 'parallel' elsewhere."""
    try:
        kind = jax.devices()[0].device_kind.lower()
    except Exception:
        kind = ""
    if "v7" in kind:
        return getattr(pltpu, "CORE_PARALLEL", "parallel"), 2
    return "parallel", 1


@partial(jax.jit, static_argnames=("block_b",))
def value_network_pallas(state_input, visual_input, prepared, block_b=1024):
    """Forward pass of ValueNetwork as a single batch-gridded Pallas kernel."""
    w1p, w2p, w3p, w4r, b12p, b3r, b4s = prepared
    B, state_dim = state_input.shape
    visual_dim = visual_input.shape[1]

    semantics, n_cores = _batch_dim_semantics()

    # Adaptive batch tile: <8 rows of padding per block; on v7x force >=2 grid
    # steps (when the batch is big enough) so both TensorCores get work.
    min_blocks = n_cores if (n_cores > 1 and B >= 512) else 1
    nblocks = max(-(-B // block_b), min_blocks)
    tb = _round_up(-(-B // nblocks), 8)
    b_pad = tb * nblocks

    if b_pad != B:  # tiny (<8*nblocks rows), only the narrow inputs are padded
        pad = ((0, b_pad - B), (0, 0))
        state_input = jnp.pad(state_input, pad)
        visual_input = jnp.pad(visual_input, pad)

    out = pl.pallas_call(
        value_net_kernel,
        out_shape=jax.ShapeDtypeStruct((nblocks, 1, tb), jnp.float32),
        grid=(nblocks,),
        in_specs=[
            pl.BlockSpec((tb, state_dim), lambda i: (i, 0)),    # activations
            pl.BlockSpec((tb, visual_dim), lambda i: (i, 0)),   # activations
            pl.BlockSpec(w1p.shape, lambda i: (0, 0)),          # resident
            pl.BlockSpec(w2p.shape, lambda i: (0, 0)),          # resident
            pl.BlockSpec(w3p.shape, lambda i: (0, 0)),          # resident
            pl.BlockSpec(w4r.shape, lambda i: (0, 0)),          # resident
            pl.BlockSpec(b12p.shape, lambda i: (0, 0)),         # resident
            pl.BlockSpec(b3r.shape, lambda i: (0, 0)),          # resident
            pl.BlockSpec(memory_space=pltpu.MemorySpace.SMEM),  # b4 scalar
        ],
        out_specs=pl.BlockSpec((1, 1, tb), lambda i: (i, 0, 0)),  # lane-dense
        compiler_params=pltpu.CompilerParams(
            dimension_semantics=(semantics,),
            vmem_limit_bytes=32 * 1024 * 1024,  # footprint ~2 MiB; safe on v7x
        ),
    )(state_input, visual_input, w1p, w2p, w3p, w4r, b12p, b3r, b4s)

    return out.reshape(b_pad, 1)[:B]


def value_network_ref(state_input, visual_input, params):
    """Pure-JAX f32 reference mirroring the PyTorch forward exactly."""
    (w1, b1), (w2, b2), (w3, b3), (w4, b4) = params
    s_emb = jax.nn.relu(state_input @ w1.T + b1)
    v_emb = jax.nn.relu(visual_input @ w2.T + b2)
    combined = jnp.concatenate([s_emb, v_emb], axis=1)
    combined = jax.nn.relu(combined @ w3.T + b3)
    return combined @ w4.T + b4


def init_params(key, state_dim, visual_dim):
    """PyTorch-Linear-style init: uniform(-1/sqrt(in), 1/sqrt(in))."""
    def linear(key, in_dim, out_dim):
        kw, kb = jax.random.split(key)
        bound = 1.0 / jnp.sqrt(float(in_dim))
        w = jax.random.uniform(kw, (out_dim, in_dim), jnp.float32, -bound, bound)
        b = jax.random.uniform(kb, (out_dim,), jnp.float32, -bound, bound)
        return w, b

    k1, k2, k3, k4 = jax.random.split(key, 4)
    return (linear(k1, state_dim, 25),
            linear(k2, visual_dim, 128),
            linear(k3, 153, 128),
            linear(k4, 128, 1))


if __name__ == "__main__":
    state_dim, visual_dim = 6, 32

    key = jax.random.PRNGKey(0)
    kp, ks, kv = jax.random.split(key, 3)
    params = init_params(kp, state_dim, visual_dim)

    # Layout prep done once, outside the per-call hot path.
    prepared = prepare_params(params, state_dim, visual_dim)

    # Primary small test (B=8).
    B = 8
    state_input = jax.random.normal(ks, (B, state_dim), jnp.float32)
    visual_input = jax.random.normal(kv, (B, visual_dim), jnp.float32)

    out = value_network_pallas(state_input, visual_input, prepared)
    out = jax.block_until_ready(out)
    ref = value_network_ref(state_input, visual_input, params)
    assert out.shape == (B, 1), out.shape
    # bf16 matmuls with f32 accumulation -> relaxed tolerance vs f32 ref.
    assert jnp.allclose(out, ref, atol=2e-2, rtol=2e-2), (out, ref)

    # Ragged-batch test (exercises the adaptive tile + padding path).
    B2 = 13
    s2 = jax.random.normal(jax.random.PRNGKey(1), (B2, state_dim), jnp.float32)
    v2 = jax.random.normal(jax.random.PRNGKey(2), (B2, visual_dim), jnp.float32)
    out2 = jax.block_until_ready(value_network_pallas(s2, v2, prepared))
    ref2 = value_network_ref(s2, v2, params)
    assert out2.shape == (B2, 1), out2.shape
    assert jnp.allclose(out2, ref2, atol=2e-2, rtol=2e-2), (out2, ref2)

    print("KERNEL_OK")
</pallas_src>

<mosaic_0001>
module attributes {stable_mosaic.version = 11 : i64} {
  func.func @value_net_kernel(%arg0: i32, %arg1: memref<8x6xf32, #tpu.memory_space<vmem>>, %arg2: memref<8x32xf32, #tpu.memory_space<vmem>>, %arg3: memref<6x256xbf16, #tpu.memory_space<vmem>>, %arg4: memref<32x256xbf16, #tpu.memory_space<vmem>>, %arg5: memref<256x128xbf16, #tpu.memory_space<vmem>>, %arg6: memref<1x128xf32, #tpu.memory_space<vmem>>, %arg7: memref<1x256xf32, #tpu.memory_space<vmem>>, %arg8: memref<1x128xf32, #tpu.memory_space<vmem>>, %arg9: memref<1xf32, #tpu.memory_space<smem>>, %arg10: memref<1x1x8xf32, #tpu.memory_space<vmem>>) attributes {dimension_semantics = [#tpu.dimension_semantics<parallel>], iteration_bounds = array<i64: 1>, scalar_prefetch = 0 : i64, scratch_operands = 0 : i64, tpu.core_type = #tpu.core_type<tc>, window_params = [{transform_indices = @transform_0, window_bounds = array<i64: 8, 6>}, {transform_indices = @transform_1, window_bounds = array<i64: 8, 32>}, {pipeline_mode = #tpu.pipeline_mode<synchronous>, transform_indices = @transform_2, window_bounds = array<i64: 6, 256>}, {pipeline_mode = #tpu.pipeline_mode<synchronous>, transform_indices = @transform_3, window_bounds = array<i64: 32, 256>}, {pipeline_mode = #tpu.pipeline_mode<synchronous>, transform_indices = @transform_4, window_bounds = array<i64: 256, 128>}, {pipeline_mode = #tpu.pipeline_mode<synchronous>, transform_indices = @transform_5, window_bounds = array<i64: 1, 128>}, {pipeline_mode = #tpu.pipeline_mode<synchronous>, transform_indices = @transform_6, window_bounds = array<i64: 1, 256>}, {pipeline_mode = #tpu.pipeline_mode<synchronous>, transform_indices = @transform_7, window_bounds = array<i64: 1, 128>}, {transform_indices = @transform_8, window_bounds = array<i64: 1>}, {transform_indices = @transform_9, window_bounds = array<i64: 1, 1, 8>}]} {
    %c0 = arith.constant 0 : index
    %c0_0 = arith.constant 0 : index
    %0 = vector.load %arg1[%c0, %c0_0] : memref<8x6xf32, #tpu.memory_space<vmem>>, vector<8x6xf32>
    %1 = arith.truncf %0 : vector<8x6xf32> to vector<8x6xbf16>
    %c0_1 = arith.constant 0 : index
    %c0_2 = arith.constant 0 : index
    %2 = vector.load %arg2[%c0_1, %c0_2] : memref<8x32xf32, #tpu.memory_space<vmem>>, vector<8x32xf32>
    %3 = arith.truncf %2 : vector<8x32xf32> to vector<8x32xbf16>
    %c0_3 = arith.constant 0 : index
    %c0_4 = arith.constant 0 : index
    %4 = vector.load %arg3[%c0_3, %c0_4] : memref<6x256xbf16, #tpu.memory_space<vmem>>, vector<6x256xbf16>
    %cst = arith.constant dense<0.000000e+00> : vector<8x256xf32>
    %5 = tpu.matmul %1, %4, %cst {dimension_numbers = #tpu.dot_dimension_numbers<[1], [0], [0], [1], [0, 0, 1, 1], [], []>} : vector<8x6xbf16>, vector<6x256xbf16>, vector<8x256xf32> -> vector<8x256xf32>
    %c0_5 = arith.constant 0 : index
    %c0_6 = arith.constant 0 : index
    %6 = vector.load %arg4[%c0_5, %c0_6] : memref<32x256xbf16, #tpu.memory_space<vmem>>, vector<32x256xbf16>
    %cst_7 = arith.constant dense<0.000000e+00> : vector<8x256xf32>
    %7 = tpu.matmul %3, %6, %cst_7 {dimension_numbers = #tpu.dot_dimension_numbers<[1], [0], [0], [1], [0, 0, 1, 1], [], []>} : vector<8x32xbf16>, vector<32x256xbf16>, vector<8x256xf32> -> vector<8x256xf32>
    %8 = arith.addf %5, %7 : vector<8x256xf32>
    %c0_8 = arith.constant 0 : index
    %c0_9 = arith.constant 0 : index
    %9 = vector.load %arg7[%c0_8, %c0_9] : memref<1x256xf32, #tpu.memory_space<vmem>>, vector<1x256xf32>
    %10 = vector.broadcast %9 : vector<1x256xf32> to vector<8x256xf32>
    %11 = arith.addf %8, %10 : vector<8x256xf32>
    %cst_10 = arith.constant 0.000000e+00 : f32
    %12 = vector.broadcast %cst_10 : f32 to vector<8x256xf32>
    %13 = arith.maximumf %11, %12 : vector<8x256xf32>
    %14 = arith.truncf %13 : vector<8x256xf32> to vector<8x256xbf16>
    %c0_11 = arith.constant 0 : index
    %c0_12 = arith.constant 0 : index
    %15 = vector.load %arg5[%c0_11, %c0_12] : memref<256x128xbf16, #tpu.memory_space<vmem>>, vector<256x128xbf16>
    %cst_13 = arith.constant dense<0.000000e+00> : vector<8x128xf32>
    %16 = tpu.matmul %14, %15, %cst_13 {dimension_numbers = #tpu.dot_dimension_numbers<[1], [0], [0], [1], [0, 0, 1, 1], [], []>} : vector<8x256xbf16>, vector<256x128xbf16>, vector<8x128xf32> -> vector<8x128xf32>
    %c0_14 = arith.constant 0 : index
    %c0_15 = arith.constant 0 : index
    %17 = vector.load %arg8[%c0_14, %c0_15] : memref<1x128xf32, #tpu.memory_space<vmem>>, vector<1x128xf32>
    %18 = vector.broadcast %17 : vector<1x128xf32> to vector<8x128xf32>
    %19 = arith.addf %16, %18 : vector<8x128xf32>
    %cst_16 = arith.constant 0.000000e+00 : f32
    %20 = vector.broadcast %cst_16 : f32 to vector<8x128xf32>
    %21 = arith.maximumf %19, %20 : vector<8x128xf32>
    %c0_17 = arith.constant 0 : index
    %c0_18 = arith.constant 0 : index
    %22 = vector.load %arg6[%c0_17, %c0_18] : memref<1x128xf32, #tpu.memory_space<vmem>>, vector<1x128xf32>
    %23 = tpu.transpose %21, [1, 0] : vector<8x128xf32> -> vector<128x8xf32>
    %cst_19 = arith.constant dense<0.000000e+00> : vector<1x8xf32>
    %24 = tpu.matmul %22, %23, %cst_19 {dimension_numbers = #tpu.dot_dimension_numbers<[1], [0], [0], [1], [0, 0, 1, 1], [], []>} : vector<1x128xf32>, vector<128x8xf32>, vector<1x8xf32> -> vector<1x8xf32>
    %c0_20 = arith.constant 0 : index
    %25 = memref.load %arg9[%c0_20] : memref<1xf32, #tpu.memory_space<smem>>
    %26 = vector.broadcast %25 : f32 to vector<1x8xf32>
    %27 = arith.addf %24, %26 : vector<1x8xf32>
    %c0_21 = arith.constant 0 : index
    %c0_22 = arith.constant 0 : index
    %c0_23 = arith.constant 0 : index
    %28 = vector.load %arg10[%c0_21, %c0_22, %c0_23] : memref<1x1x8xf32, #tpu.memory_space<vmem>>, vector<1x1x8xf32>
    %29 = vector.shape_cast %28 : vector<1x1x8xf32> to vector<1x8xf32>
    %30 = vector.shape_cast %27 : vector<1x8xf32> to vector<1x1x8xf32>
    tpu.vector_store %arg10[%c0_21, %c0_22, %c0_23], %30 {strides = array<i32>} : memref<1x1x8xf32, #tpu.memory_space<vmem>>, vector<1x1x8xf32>,
    return
  }
  func.func @transform_0(%arg0: i32) -> (i32, i32) {
    %c0_i32 = arith.constant 0 : i32
    %c0_i32_0 = arith.constant 0 : i32
    return %arg0, %c0_i32 : i32, i32
  }
  func.func @transform_1(%arg0: i32) -> (i32, i32) {
    %c0_i32 = arith.constant 0 : i32
    %c0_i32_0 = arith.constant 0 : i32
    return %arg0, %c0_i32 : i32, i32
  }
  func.func @transform_2(%arg0: i32) -> (i32, i32) {
    %c0_i32 = arith.constant 0 : i32
    %c0_i32_0 = arith.constant 0 : i32
    %c0_i32_1 = arith.constant 0 : i32
    return %c0_i32, %c0_i32_0 : i32, i32
  }
  func.func @transform_3(%arg0: i32) -> (i32, i32) {
    %c0_i32 = arith.constant 0 : i32
    %c0_i32_0 = arith.constant 0 : i32
    %c0_i32_1 = arith.constant 0 : i32
    return %c0_i32, %c0_i32_0 : i32, i32
  }
  func.func @transform_4(%arg0: i32) -> (i32, i32) {
    %c0_i32 = arith.constant 0 : i32
    %c0_i32_0 = arith.constant 0 : i32
    %c0_i32_1 = arith.constant 0 : i32
    return %c0_i32, %c0_i32_0 : i32, i32
  }
  func.func @transform_5(%arg0: i32) -> (i32, i32) {
    %c0_i32 = arith.constant 0 : i32
    %c0_i32_0 = arith.constant 0 : i32
    %c0_i32_1 = arith.constant 0 : i32
    return %c0_i32, %c0_i32_0 : i32, i32
  }
  func.func @transform_6(%arg0: i32) -> (i32, i32) {
    %c0_i32 = arith.constant 0 : i32
    %c0_i32_0 = arith.constant 0 : i32
    %c0_i32_1 = arith.constant 0 : i32
    return %c0_i32, %c0_i32_0 : i32, i32
  }
  func.func @transform_7(%arg0: i32) -> (i32, i32) {
    %c0_i32 = arith.constant 0 : i32
    %c0_i32_0 = arith.constant 0 : i32
    %c0_i32_1 = arith.constant 0 : i32
    return %c0_i32, %c0_i32_0 : i32, i32
  }
  func.func @transform_8(%arg0: i32) -> i32 {
    %c0_i32 = arith.constant 0 : i32
    %c0_i32_0 = arith.constant 0 : i32
    return %c0_i32 : i32
  }
  func.func @transform_9(%arg0: i32) -> (i32, i32, i32) {
    %c0_i32 = arith.constant 0 : i32
    %c0_i32_0 = arith.constant 0 : i32
    %c0_i32_1 = arith.constant 0 : i32
    return %arg0, %c0_i32, %c0_i32_0 : i32, i32, i32
  }
}

</mosaic_0001>

<llo_original>
// kernel: value_network_pallas.1
$region0: #{value_network_pallas.1}
  #allocation0 [shape = 'u32[]', space=smem, size = 0x4, offset = 0x4, fixed_abs, tag = 'smem constant byte address 0x4 - core index']
  #allocation1 [shape = 'u32[144,128]{1,0:T(1,128)}', space=vmem, size = 0x12000, scoped, tag = 'internal scratch']
  #allocation2 [shape = 'f32[1]{0:T(128)S(6)}', space=smem, size = 0x200, scoped, tag = 'scoped memory for value_network_pallas.1']
  %s0 = inlined_call_operand.hbm [shape: f32[8,6], index: 0, kind: input, shape index: {}]
  %s1 = inlined_call_operand.hbm [shape: f32[8,32], index: 1, kind: input, shape index: {}]
  %s2 = inlined_call_operand.vmem [shape: bf16[6,256], index: 2, kind: input, shape index: {}]
  %s3 = inlined_call_operand.hbm [shape: bf16[32,256], index: 3, kind: input, shape index: {}]
  %s4 = inlined_call_operand.hbm [shape: bf16[256,128], index: 4, kind: input, shape index: {}]
  %s5 = inlined_call_operand.vmem [shape: f32[1,128], index: 5, kind: input, shape index: {}]
  %s6 = inlined_call_operand.vmem [shape: f32[1,256], index: 6, kind: input, shape index: {}]
  %s7 = inlined_call_operand.vmem [shape: f32[1,128], index: 7, kind: input, shape index: {}]
  %s8 = inlined_call_operand.<no memory space> [shape: f32[1], index: 8, kind: input, shape index: {}]
  %s9 = inlined_call_operand.hbm [shape: f32[1,1,8], index: 9, kind: output, shape index: {}]
  %s10 = sld [smem:[#allocation0]]
  $region62: #{value_network_pallas.1} parent=0
    _
  %s12 = ssub.s32 1, %s10
  %s13 = scalar_select 0, %s12, %s10
  %14 = sst [smem:[#allocation2]] %s8
  $region1: #{value_network_pallas.1} parent=0
    #allocation3 [shape = 'u8[4096]{0}', space=vmem, size = 0x1000, scoped, tag = 'input window, operand 0, single buffered']
    #allocation4 [shape = 's32[1]{0}', space=sflag, size = 0x4, scoped, tag = 'scoped memory for value_network_pallas.1']
    #allocation5 [shape = 's32[1]{0}', space=sflag, size = 0x4, scoped, tag = 'scoped memory for value_network_pallas.1']
    #allocation6 [shape = 'u8[4096]{0}', space=vmem, size = 0x1000, scoped, tag = 'input window, operand 1, single buffered']
    #allocation7 [shape = 's32[1]{0}', space=sflag, size = 0x4, scoped, tag = 'scoped memory for value_network_pallas.1']
    #allocation8 [shape = 'u8[16384]{0}', space=vmem, size = 0x4000, scoped, tag = 'input window, operand 3, single buffered']
    #allocation9 [shape = 'u8[65536]{0}', space=vmem, size = 0x10000, scoped, tag = 'input window, operand 4, single buffered']
    #allocation10 [shape = 's32[1]{0}', space=sflag, size = 0x4, scoped, tag = 'scoped memory for value_network_pallas.1']
    #allocation11 [shape = 'u8[512]{0}', space=vmem, size = 0x400, scoped, tag = 'output window, operand 0, single buffered']
    %15 = vsyncpa [#allocation4], 0
    %16 = vsyncpa [#allocation7], 0
    %17 = vsyncpa [#allocation10], 0
    %18 = vsyncpa [#allocation5], 0
    // Predicated region
    $region2: #{value_network_pallas.1} parent=1 // pred_check
      _
    $region3: #{value_network_pallas.1} parent=1 // pred_check_branch
      %20 = sbr.rel (0) target = $region5
    $region4: #{value_network_pallas.1} parent=1 // pred_region
      %s22 = ssub.s32 128, 128
      %23 = vsyncadd [#allocation4], %s22
      %s25 = sshll.u32 [#allocation3], 4
      %s26 = int_to_ptr.vmem [resolvable:$true] %s25
      %28 = dma.hbm_to_vmem [thread:$0]  %s0, 128, %s26, [#allocation4]
    $region5: #{value_network_pallas.1} parent=1 // pred_fallthru
      _
    // Predicated region
    $region6: #{value_network_pallas.1} parent=1 // pred_check
      _
    $region7: #{value_network_pallas.1} parent=1 // pred_check_branch
      %30 = sbr.rel (0) target = $region9
    $region8: #{value_network_pallas.1} parent=1 // pred_region
      %s32 = ssub.s32 128, 128
      %33 = vsyncadd [#allocation7], %s32
      %s35 = sshll.u32 [#allocation6], 4
      %s36 = int_to_ptr.vmem [resolvable:$true] %s35
      %38 = dma.hbm_to_vmem [thread:$0]  %s1, 128, %s36, [#allocation7]
    $region9: #{value_network_pallas.1} parent=1 // pred_fallthru
      _
    // Predicated region
    $region10: #{value_network_pallas.1} parent=1 // pred_check
      _
    $region11: #{value_network_pallas.1} parent=1 // pred_check_branch
      %40 = sbr.rel (0) target = $region13
    $region12: #{value_network_pallas.1} parent=1 // pred_region
      _
    $region13: #{value_network_pallas.1} parent=1 // pred_fallthru
      _
    // Predicated region
    $region14: #{value_network_pallas.1} parent=1 // pred_check
      _
    $region15: #{value_network_pallas.1} parent=1 // pred_check_branch
      %42 = sbr.rel (0) target = $region17
    $region16: #{value_network_pallas.1} parent=1 // pred_region
      %s44 = ssub.s32 512, 512
      %45 = vsyncadd [#allocation7], %s44
      %s46 = sshll.u32 [#allocation8], 4
      %s47 = int_to_ptr.vmem [resolvable:$true] %s46
      %52 = dma.hbm_to_vmem [thread:$0]  %s3, 512, %s47, [#allocation7], 128, 128, 8
    $region17: #{value_network_pallas.1} parent=1 // pred_fallthru
      _
    // Predicated region
    $region18: #{value_network_pallas.1} parent=1 // pred_check
      _
    $region19: #{value_network_pallas.1} parent=1 // pred_check_branch
      %54 = sbr.rel (0) target = $region21
    $region20: #{value_network_pallas.1} parent=1 // pred_region
      %s56 = ssub.s32 2048, 2048
      %57 = vsyncadd [#allocation10], %s56
      %s58 = sshll.u32 [#allocation9], 4
      %s59 = int_to_ptr.vmem [resolvable:$true] %s58
      %64 = dma.hbm_to_vmem [thread:$0]  %s4, 2048, %s59, [#allocation10], 64, 64, 4
    $region21: #{value_network_pallas.1} parent=1 // pred_fallthru
      _
    // Predicated region
    $region22: #{value_network_pallas.1} parent=1 // pred_check
      _
    $region23: #{value_network_pallas.1} parent=1 // pred_check_branch
      %66 = sbr.rel (0) target = $region25
    $region24: #{value_network_pallas.1} parent=1 // pred_region
      _
    $region25: #{value_network_pallas.1} parent=1 // pred_fallthru
      _
    // Predicated region
    $region26: #{value_network_pallas.1} parent=1 // pred_check
      _
    $region27: #{value_network_pallas.1} parent=1 // pred_check_branch
      %68 = sbr.rel (0) target = $region29
    $region28: #{value_network_pallas.1} parent=1 // pred_region
      _
    $region29: #{value_network_pallas.1} parent=1 // pred_fallthru
      _
    // Predicated region
    $region30: #{value_network_pallas.1} parent=1 // pred_check
      _
    $region31: #{value_network_pallas.1} parent=1 // pred_check_branch
      %70 = sbr.rel (0) target = $region33
    $region32: #{value_network_pallas.1} parent=1 // pred_region
      _
    $region33: #{value_network_pallas.1} parent=1 // pred_fallthru
      _
    // Predicated region
    $region34: #{value_network_pallas.1} parent=1 // pred_check
      _
    $region35: #{value_network_pallas.1} parent=1 // pred_check_branch
      %72 = sbr.rel (0) target = $region37
    $region36: #{value_network_pallas.1} parent=1 // pred_region
      _
    $region37: #{value_network_pallas.1} parent=1 // pred_fallthru
      _
    // Predicated region
    $region38: #{value_network_pallas.1} parent=1 // pred_check
      _
    $region39: #{value_network_pallas.1} parent=1 // pred_check_branch
      %74 = sbr.rel (0) target = $region41
    $region40: #{value_network_pallas.1} parent=1 // pred_region
      %75 = dma.done [#allocation4], 128
    $region41: #{value_network_pallas.1} parent=1 // pred_fallthru
      _
    // Predicated region
    $region42: #{value_network_pallas.1} parent=1 // pred_check
      _
    $region43: #{value_network_pallas.1} parent=1 // pred_check_branch
      %77 = sbr.rel (0) target = $region45
    $region44: #{value_network_pallas.1} parent=1 // pred_region
      %78 = dma.done [#allocation7], 128
    $region45: #{value_network_pallas.1} parent=1 // pred_fallthru
      _
    // Predicated region
    $region46: #{value_network_pallas.1} parent=1 // pred_check
      _
    $region47: #{value_network_pallas.1} parent=1 // pred_check_branch
      %80 = sbr.rel (0) target = $region49
    $region48: #{value_network_pallas.1} parent=1 // pred_region
      %81 = dma.done [#allocation7], 512
    $region49: #{value_network_pallas.1} parent=1 // pred_fallthru
      _
    // Predicated region
    $region50: #{value_network_pallas.1} parent=1 // pred_check
      _
    $region51: #{value_network_pallas.1} parent=1 // pred_check_branch
      %83 = sbr.rel (0) target = $region53
    $region52: #{value_network_pallas.1} parent=1 // pred_region
      %84 = dma.done [#allocation10], 2048
    $region53: #{value_network_pallas.1} parent=1 // pred_fallthru
      _
    %v86 = vld [vmem:[#allocation3] sm:$0xff]
    %v87 = vpack.c.bf16 %v86, %v86
    %v88 = vld [vmem:[#allocation6] sm:$0xff]
    %v89 = vpack.c.bf16 %v88, %v88
    %v90 = vld [vmem:[%s2] sm:$0x77]
    %v91 = vld [vmem:[#allocation8] sm:$0xff]
    %v92 = vld [vmem:[#allocation8 + $0x8] sm:$0xff]
    %v93 = vld [vmem:[#allocation8 + $0x10] sm:$0xff]
    %v94 = vld [vmem:[#allocation8 + $0x18] sm:$0xff]
    %v99 = vunpack.c.l.b16 %v91
    %v100 = vunpack.c.h.b16 %v91
    %v101 = vunpack.c.l.b16 %v92
    %v102 = vunpack.c.h.b16 %v92
    %v103 = vunpack.c.l.b16 %v93
    %v104 = vunpack.c.h.b16 %v93
    %v105 = vunpack.c.l.b16 %v94
    %v106 = vunpack.c.h.b16 %v94
    %v107 = vpack.c.b16 %v101, %v99
    %v108 = vpack.c.b16 %v102, %v100
    %v109 = vpack.c.b16 %v105, %v103
    %v110 = vpack.c.b16 %v106, %v104
    %vm115 = vcmask 261120
    %v117 = vsel %vm115, %v89, 0
    %119 = vmatprep.subr.bf16.mxu0 %v108
    %120 = vmatpush1.bf16.msra.mxu0 %v107
    %121 = vmatprep.subr.bf16.mxu0 %v110
    %122 = vmatpush1.bf16.msra.mxu0 %v109
    %123 = vmatprep.subr.bf16.mxu0 0
    %124 = vmatpush1.bf16.msra.mxu0 0
    %125 = vmatprep.subr.bf16.mxu0 0
    %126 = vmatpush1.bf16.msra.mxu0 0
    %127 = vmatprep.subr.bf16.mxu0 0
    %128 = vmatpush1.bf16.msra.mxu0 0
    %129 = vmatprep.subr.bf16.mxu0 0
    %130 = vmatpush1.bf16.msra.mxu0 0
    %131 = vmatprep.subr.bf16.mxu0 0
    %132 = vmatpush1.bf16.msra.mxu0 0
    %133 = vmatprep.subr.bf16.mxu0 0
    %134 = vmatpush1.bf16.msra.mxu0 0
    %135 = vmatprep.subr.bf16.mxu0 0
    %136 = vmatpush1.bf16.msra.mxu0 0
    %137 = vmatprep.subr.bf16.mxu0 0
    %138 = vmatpush1.bf16.msra.mxu0 0
    %139 = vmatprep.subr.bf16.mxu0 0
    %140 = vmatpush1.bf16.msra.mxu0 0
    %141 = vmatprep.subr.bf16.mxu0 0
    %142 = vmatpush1.bf16.msra.mxu0 0
    %143 = vmatprep.subr.bf16.mxu0 0
    %144 = vmatpush1.bf16.msra.mxu0 0
    %145 = vmatprep.subr.bf16.mxu0 0
    %146 = vmatpush1.bf16.msra.mxu0 0
    %147 = vmatprep.subr.bf16.mxu0 0
    %148 = vmatpush1.bf16.msra.mxu0 0
    %149 = vmatprep.subr.bf16.mxu0 0
    %150 = vmatpush1.bf16.msra.mxu0 0
    %151 = vmatprep.mubr.bf16.mxu0 0
    %152 = vmatmul.mubr.bf16.gmra.mrb[0].mxu0 %v117
    %v153 = vpop.f32.mrb[0].mxu0
    %v154 = vadd.f32 0.0, %v153
    %v155 = vpop.f32.mrb[0].mxu0
    %v156 = vadd.f32 0.0, %v155
    %v157 = vpop.f32.mrb[0].mxu0
    %v158 = vpop.f32.mrb[0].mxu0
    %159 = vdwg.mxu0
    %v161 = vunpack.c.l.b16 %v90
    %v162 = vunpack.c.h.b16 %v90
    %v163 = vpack.c.b16 %v161, %v161
    %v164 = vpack.c.b16 %v162, %v162
    %vm165 = vcmask 48128
    %v167 = vsel %vm165, %v87, 0
    %vm169 = vcmask 1042432
    %v171 = vsel %vm169, %v163, 0
    %v174 = vsel %vm169, %v164, 0
    %176 = vmatprep.subr.bf16.mxu0 %v174
    %177 = vmatpush1.bf16.msra.mxu0 %v171
    %178 = vmatprep.subr.bf16.mxu0 0
    %179 = vmatpush1.bf16.msra.mxu0 0
    %180 = vmatprep.subr.bf16.mxu0 0
    %181 = vmatpush1.bf16.msra.mxu0 0
    %182 = vmatprep.subr.bf16.mxu0 0
    %183 = vmatpush1.bf16.msra.mxu0 0
    %184 = vmatprep.subr.bf16.mxu0 0
    %185 = vmatpush1.bf16.msra.mxu0 0
    %186 = vmatprep.subr.bf16.mxu0 0
    %187 = vmatpush1.bf16.msra.mxu0 0
    %188 = vmatprep.subr.bf16.mxu0 0
    %189 = vmatpush1.bf16.msra.mxu0 0
    %190 = vmatprep.subr.bf16.mxu0 0
    %191 = vmatpush1.bf16.msra.mxu0 0
    %192 = vmatprep.subr.bf16.mxu0 0
    %193 = vmatpush1.bf16.msra.mxu0 0
    %194 = vmatprep.subr.bf16.mxu0 0
    %195 = vmatpush1.bf16.msra.mxu0 0
    %196 = vmatprep.subr.bf16.mxu0 0
    %197 = vmatpush1.bf16.msra.mxu0 0
    %198 = vmatprep.subr.bf16.mxu0 0
    %199 = vmatpush1.bf16.msra.mxu0 0
    %200 = vmatprep.subr.bf16.mxu0 0
    %201 = vmatpush1.bf16.msra.mxu0 0
    %202 = vmatprep.subr.bf16.mxu0 0
    %203 = vmatpush1.bf16.msra.mxu0 0
    %204 = vmatprep.subr.bf16.mxu0 0
    %205 = vmatpush1.bf16.msra.mxu0 0
    %206 = vmatprep.subr.bf16.mxu0 0
    %207 = vmatpush1.bf16.msra.mxu0 0
    %208 = vmatprep.mubr.bf16.mxu0 0
    %209 = vmatmul.mubr.bf16.gmra.mrb[0].mxu0 %v167
    %v210 = vpop.f32.mrb[0].mxu0
    %v211 = vadd.f32 %v154, %v210
    %v212 = vpop.f32.mrb[0].mxu0
    %v213 = vadd.f32 %v156, %v212
    %v214 = vpop.f32.mrb[0].mxu0
    %v215 = vpop.f32.mrb[0].mxu0
    %216 = vdwg.mxu0
    %v217 = vld [vmem:[%s6] sm:$0x3]
    %v219 = vlaneseq
    %v220 = vshrl.u32 %v219, 7
    %v221 = vsub.s32 0, %v220
    %v222 = vrot.slane %v217, %v221
    %v223 = vlaneseq
    %v224 = vshrl.u32 %v223, 7
    %v225 = vsub.s32 1, %v224
    %v226 = vrot.slane %v217, %v225
    %v229 = vadd.f32 %v211, %v222
    %v230 = vadd.f32 %v213, %v226
    %v231 = vmax.f32 %v229, 0.0
    %v232 = vmax.f32 %v230, 0.0
    %v233 = vpack.c.bf16 %v231, %v231
    %v234 = vpack.c.bf16 %v232, %v232
    %v235 = vld [vmem:[#allocation9] sm:$0xf]
    %v236 = vld [vmem:[#allocation9 + $0x4] sm:$0xf]
    %v237 = vld [vmem:[#allocation9 + $0x8] sm:$0xf]
    %v238 = vld [vmem:[#allocation9 + $0xc] sm:$0xf]
    %v239 = vld [vmem:[#allocation9 + $0x10] sm:$0xf]
    %v240 = vld [vmem:[#allocation9 + $0x14] sm:$0xf]
    %v241 = vld [vmem:[#allocation9 + $0x18] sm:$0xf]
    %v242 = vld [vmem:[#allocation9 + $0x1c] sm:$0xf]
    %v243 = vld [vmem:[#allocation9 + $0x20] sm:$0xf]
    %v244 = vld [vmem:[#allocation9 + $0x24] sm:$0xf]
    %v245 = vld [vmem:[#allocation9 + $0x28] sm:$0xf]
    %v246 = vld [vmem:[#allocation9 + $0x2c] sm:$0xf]
    %v247 = vld [vmem:[#allocation9 + $0x30] sm:$0xf]
    %v248 = vld [vmem:[#allocation9 + $0x34] sm:$0xf]
    %v249 = vld [vmem:[#allocation9 + $0x38] sm:$0xf]
    %v250 = vld [vmem:[#allocation9 + $0x3c] sm:$0xf]
    %v251 = vld [vmem:[#allocation9 + $0x40] sm:$0xf]
    %v252 = vld [vmem:[#allocation9 + $0x44] sm:$0xf]
    %v253 = vld [vmem:[#allocation9 + $0x48] sm:$0xf]
    %v254 = vld [vmem:[#allocation9 + $0x4c] sm:$0xf]
    %v255 = vld [vmem:[#allocation9 + $0x50] sm:$0xf]
    %v256 = vld [vmem:[#allocation9 + $0x54] sm:$0xf]
    %v257 = vld [vmem:[#allocation9 + $0x58] sm:$0xf]
    %v258 = vld [vmem:[#allocation9 + $0x5c] sm:$0xf]
    %v259 = vld [vmem:[#allocation9 + $0x60] sm:$0xf]
    %v260 = vld [vmem:[#allocation9 + $0x64] sm:$0xf]
    %v261 = vld [vmem:[#allocation9 + $0x68] sm:$0xf]
    %v262 = vld [vmem:[#allocation9 + $0x6c] sm:$0xf]
    %v263 = vld [vmem:[#allocation9 + $0x70] sm:$0xf]
    %v264 = vld [vmem:[#allocation9 + $0x74] sm:$0xf]
    %v265 = vld [vmem:[#allocation9 + $0x78] sm:$0xf]
    %v266 = vld [vmem:[#allocation9 + $0x7c] sm:$0xf]
    %v267 = vld [vmem:[%s7] sm:$0x1]
    %v269 = vlaneseq
    %v270 = vshrl.u32 %v269, 7
    %v271 = vsub.s32 0, %v270
    %v272 = vrot.slane %v267, %v271
    %v306 = vunpack.c.l.b16 %v235
    %v307 = vunpack.c.l.b16 %v236
    %v308 = vunpack.c.l.b16 %v237
    %v309 = vunpack.c.l.b16 %v238
    %v310 = vunpack.c.l.b16 %v239
    %v311 = vunpack.c.l.b16 %v240
    %v312 = vunpack.c.l.b16 %v241
    %v313 = vunpack.c.l.b16 %v242
    %v314 = vunpack.c.l.b16 %v243
    %v315 = vunpack.c.l.b16 %v244
    %v316 = vunpack.c.l.b16 %v245
    %v317 = vunpack.c.l.b16 %v246
    %v318 = vunpack.c.l.b16 %v247
    %v319 = vunpack.c.l.b16 %v248
    %v320 = vunpack.c.l.b16 %v249
    %v321 = vunpack.c.l.b16 %v250
    %v322 = vunpack.c.l.b16 %v251
    %v323 = vunpack.c.l.b16 %v252
    %v324 = vunpack.c.l.b16 %v253
    %v325 = vunpack.c.l.b16 %v254
    %v326 = vunpack.c.l.b16 %v255
    %v327 = vunpack.c.l.b16 %v256
    %v328 = vunpack.c.l.b16 %v257
    %v329 = vunpack.c.l.b16 %v258
    %v330 = vunpack.c.l.b16 %v259
    %v331 = vunpack.c.l.b16 %v260
    %v332 = vunpack.c.l.b16 %v261
    %v333 = vunpack.c.l.b16 %v262
    %v334 = vunpack.c.l.b16 %v263
    %v335 = vunpack.c.l.b16 %v264
    %v336 = vunpack.c.l.b16 %v265
    %v337 = vunpack.c.l.b16 %v266
    %v338 = vpack.c.b16 %v307, %v306
    %v339 = vpack.c.b16 %v309, %v308
    %v340 = vpack.c.b16 %v311, %v310
    %v341 = vpack.c.b16 %v313, %v312
    %v342 = vpack.c.b16 %v315, %v314
    %v343 = vpack.c.b16 %v317, %v316
    %v344 = vpack.c.b16 %v319, %v318
    %v345 = vpack.c.b16 %v321, %v320
    %v346 = vpack.c.b16 %v323, %v322
    %v347 = vpack.c.b16 %v325, %v324
    %v348 = vpack.c.b16 %v327, %v326
    %v349 = vpack.c.b16 %v329, %v328
    %v350 = vpack.c.b16 %v331, %v330
    %v351 = vpack.c.b16 %v333, %v332
    %v352 = vpack.c.b16 %v335, %v334
    %v353 = vpack.c.b16 %v337, %v336
    %370 = vmatprep.subr.bf16.mxu0 0
    %371 = vmatpush1.bf16.msra.mxu0 %v338
    %372 = vmatprep.subr.bf16.mxu0 0
    %373 = vmatpush1.bf16.msra.mxu0 %v339
    %374 = vmatprep.subr.bf16.mxu0 0
    %375 = vmatpush1.bf16.msra.mxu0 %v340
    %376 = vmatprep.subr.bf16.mxu0 0
    %377 = vmatpush1.bf16.msra.mxu0 %v341
    %378 = vmatprep.subr.bf16.mxu0 0
    %379 = vmatpush1.bf16.msra.mxu0 %v342
    %380 = vmatprep.subr.bf16.mxu0 0
    %381 = vmatpush1.bf16.msra.mxu0 %v343
    %382 = vmatprep.subr.bf16.mxu0 0
    %383 = vmatpush1.bf16.msra.mxu0 %v344
    %384 = vmatprep.subr.bf16.mxu0 0
    %385 = vmatpush1.bf16.msra.mxu0 %v345
    %386 = vmatprep.subr.bf16.mxu0 0
    %387 = vmatpush1.bf16.msra.mxu0 %v346
    %388 = vmatprep.subr.bf16.mxu0 0
    %389 = vmatpush1.bf16.msra.mxu0 %v347
    %390 = vmatprep.subr.bf16.mxu0 0
    %391 = vmatpush1.bf16.msra.mxu0 %v348
    %392 = vmatprep.subr.bf16.mxu0 0
    %393 = vmatpush1.bf16.msra.mxu0 %v349
    %394 = vmatprep.subr.bf16.mxu0 0
    %395 = vmatpush1.bf16.msra.mxu0 %v350
    %396 = vmatprep.subr.bf16.mxu0 0
    %397 = vmatpush1.bf16.msra.mxu0 %v351
    %398 = vmatprep.subr.bf16.mxu0 0
    %399 = vmatpush1.bf16.msra.mxu0 %v352
    %400 = vmatprep.subr.bf16.mxu0 0
    %401 = vmatpush1.bf16.msra.mxu0 %v353
    %402 = vmatprep.mubr.bf16.mxu0 %v234
    %403 = vmatmul.mubr.bf16.gmra.mrb[0].mxu0 %v233
    %v404 = vpop.f32.mrb[0].mxu0
    %v405 = vadd.f32 %v272, %v404
    %v406 = vpop.f32.mrb[0].mxu0
    %v407 = vpop.f32.mrb[0].mxu0
    %v408 = vpop.f32.mrb[0].mxu0
    %409 = vdwg.mxu0
    %v410 = vmax.f32 %v405, 0.0
    %v411 = vld [vmem:[%s5] sm:$0x1]
    %s412 = sld [smem:[#allocation2]]
    %v413 = vstv %s412
    %414 = vmatprep.subr.mxu0 0.0
    %415 = vmatpush1.xpose.msra.mxu0 %v410
    %416 = vmatprep.subr.mxu0 0.0
    %417 = vmatpush1.xpose.msra.mxu0 0.0
    %418 = vmatprep.subr.mxu0 0.0
    %419 = vmatpush1.xpose.msra.mxu0 0.0
    %420 = vmatprep.subr.mxu0 0.0
    %421 = vmatpush1.xpose.msra.mxu0 0.0
    %422 = vmatprep.subr.mxu0 0.0
    %423 = vmatpush1.xpose.msra.mxu0 0.0
    %424 = vmatprep.subr.mxu0 0.0
    %425 = vmatpush1.xpose.msra.mxu0 0.0
    %426 = vmatprep.subr.mxu0 0.0
    %427 = vmatpush1.xpose.msra.mxu0 0.0
    %428 = vmatprep.subr.mxu0 0.0
    %429 = vmatpush1.xpose.msra.mxu0 0.0
    %430 = vmatprep.subr.mxu0 0.0
    %431 = vmatpush1.xpose.msra.mxu0 0.0
    %432 = vmatprep.subr.mxu0 0.0
    %433 = vmatpush1.xpose.msra.mxu0 0.0
    %434 = vmatprep.subr.mxu0 0.0
    %435 = vmatpush1.xpose.msra.mxu0 0.0
    %436 = vmatprep.subr.mxu0 0.0
    %437 = vmatpush1.xpose.msra.mxu0 0.0
    %438 = vmatprep.subr.mxu0 0.0
    %439 = vmatpush1.xpose.msra.mxu0 0.0
    %440 = vmatprep.subr.mxu0 0.0
    %441 = vmatpush1.xpose.msra.mxu0 0.0
    %442 = vmatprep.subr.mxu0 0.0
    %443 = vmatpush1.xpose.msra.mxu0 0.0
    %444 = vmatprep.subr.mxu0 0.0
    %445 = vmatpush1.xpose.msra.mxu0 0.0
    %446 = vmatprep.subr.mxu0 0.0
    %447 = vmatpush1.xpose.msra.mxu0 0.0
    %448 = vmatprep.subr.mxu0 0.0
    %449 = vmatpush1.xpose.msra.mxu0 0.0
    %450 = vmatprep.subr.mxu0 0.0
    %451 = vmatpush1.xpose.msra.mxu0 0.0
    %452 = vmatprep.subr.mxu0 0.0
    %453 = vmatpush1.xpose.msra.mxu0 0.0
    %454 = vmatprep.subr.mxu0 0.0
    %455 = vmatpush1.xpose.msra.mxu0 0.0
    %456 = vmatprep.subr.mxu0 0.0
    %457 = vmatpush1.xpose.msra.mxu0 0.0
    %458 = vmatprep.subr.mxu0 0.0
    %459 = vmatpush1.xpose.msra.mxu0 0.0
    %460 = vmatprep.subr.mxu0 0.0
    %461 = vmatpush1.xpose.msra.mxu0 0.0
    %462 = vmatprep.subr.mxu0 0.0
    %463 = vmatpush1.xpose.msra.mxu0 0.0
    %464 = vmatprep.subr.mxu0 0.0
    %465 = vmatpush1.xpose.msra.mxu0 0.0
    %466 = vmatprep.subr.mxu0 0.0
    %467 = vmatpush1.xpose.msra.mxu0 0.0
    %468 = vmatprep.subr.mxu0 0.0
    %469 = vmatpush1.xpose.msra.mxu0 0.0
    %470 = vmatprep.subr.mxu0 0.0
    %471 = vmatpush1.xpose.msra.mxu0 0.0
    %472 = vmatprep.subr.mxu0 0.0
    %473 = vmatpush1.xpose.msra.mxu0 0.0
    %474 = vmatprep.subr.mxu0 0.0
    %475 = vmatpush1.xpose.msra.mxu0 0.0
    %476 = vmatprep.subr.mxu0 0.0
    %477 = vmatpush1.xpose.msra.mxu0 0.0
    %478 = vmatprep.mubr.f32.mxu0 0.0
    %479 = vmatmul.mubr.f32.gmra.mrb[0].mxu0 %v411
    %v480 = vpop.f32.mrb[0].mxu0
    %v481 = vadd.f32 %v413, %v480
    %v482 = vpop.f32.mrb[0].mxu0
    %483 = vdwg.mxu0
    %vm484 = vcmask 57344
    %485 = vst.msk [vmem:[#allocation11] sm:$0x1] %vm484, %v481
    // Predicated region
    $region54: #{value_network_pallas.1} parent=1 // pred_check
      _
    $region55: #{value_network_pallas.1} parent=1 // pred_check_branch
      %487 = sbr.rel (0) target = $region57
    $region56: #{value_network_pallas.1} parent=1 // pred_region
      %s489 = ssub.s32 16, 16
      %490 = vsyncadd [#allocation5], %s489
      %s492 = sshll.u32 [#allocation11], 4
      %s493 = int_to_ptr.vmem [resolvable:$true] %s492
      %495 = dma.vmem_to_hbm [thread:$0]  %s493, 16, %s9, [#allocation5]
    $region57: #{value_network_pallas.1} parent=1 // pred_fallthru
      _
    // Predicated region
    $region58: #{value_network_pallas.1} parent=1 // pred_check
      _
    $region59: #{value_network_pallas.1} parent=1 // pred_check_branch
      %497 = sbr.rel (0) target = $region61
    $region60: #{value_network_pallas.1} parent=1 // pred_region
      %498 = dma.done [#allocation5], 16
    $region61: #{value_network_pallas.1} parent=1 // pred_fallthru
      _
    %499 = vsyncpa [#allocation4], 1
    %500 = vsyncpa [#allocation7], 1
    %501 = vsyncpa [#allocation10], 1
    %502 = vsyncpa [#allocation5], 1

</llo_original>
